<compile_context>
chip_gen: v5e
topology: v5e:2x2
jax: 0.10.0
libtpu: 0.0.40
codegen_flags: <defaults>
</compile_context>

<pallas_src>
import functools

import jax
import jax.numpy as jnp
from jax import lax
from jax.experimental import pallas as pl
from jax.experimental.pallas import tpu as pltpu

LANES = 128
SUBLANES = 8
ROW_ALIGN = 8            # f32 sublane alignment for the row-block dimension
CHUNK_ROWS = 256         # rows per in-kernel reduction chunk (32 f32 vregs/input)
BLOCK_ROWS_MAX = 8192    # 8192 * 128 * 4 B = 4 MiB per f32 input block


def _round_up(x: int, m: int) -> int:
    return ((x + m - 1) // m) * m


def _cdiv(a: int, b: int) -> int:
    return (a + b - 1) // b


def _sq_diff_sum_kernel(p_ref, a_ref, o_ref, *, block_rows, chunk_rows,
                        rows_total, blocks_per_core, need_mask):
    """Accumulate sum((p - a)^2) of this row-block into a resident (8,128) acc."""
    c = pl.program_id(0)   # "parallel" axis (TensorCore split on v7x)
    s = pl.program_id(1)   # "arbitrary" reduction axis

    @pl.when(s == 0)
    def _():
        o_ref[...] = jnp.zeros_like(o_ref)

    block_global = c * blocks_per_core + s
    num_chunks = block_rows // chunk_rows

    def partial_sum(masked):
        # Chunked reduction: bounds vreg live ranges explicitly; no multi-MiB
        # d/sq intermediates ever materialize in VMEM.
        def body(ci, acc):
            r0 = pl.multiple_of(ci * chunk_rows, chunk_rows)
            pv = p_ref[pl.ds(r0, chunk_rows), :].astype(jnp.float32)
            av = a_ref[pl.ds(r0, chunk_rows), :].astype(jnp.float32)
            d = pv - av
            sq = d * d
            if masked:
                # Overhanging rows (past rows_total) read uninitialized VMEM;
                # the select (NOT a multiplicative mask) discards any NaN/Inf.
                row_ids = (block_global * block_rows + r0
                           + lax.broadcasted_iota(jnp.int32, sq.shape, 0))
                sq = jnp.where(row_ids < rows_total, sq, jnp.float32(0.0))
            return acc + sq.reshape(-1, SUBLANES, LANES).sum(axis=0)

        return lax.fori_loop(0, num_chunks, body,
                             jnp.zeros((SUBLANES, LANES), jnp.float32))

    if need_mask:
        full_blocks = rows_total // block_rows   # blocks entirely in range
        # Only the final (partial) block and any duplicated overhang block pay
        # the iota/cmp/select; all full blocks stay on the sub/mul/add path.

        @pl.when(block_global < full_blocks)
        def _():
            o_ref[...] += partial_sum(False)

        @pl.when(block_global >= full_blocks)
        def _():
            o_ref[...] += partial_sum(True)
    else:
        o_ref[...] += partial_sum(False)


def rmse_loss(predicted: jax.Array, actual: jax.Array) -> jax.Array:
    """sqrt(mean((predicted - actual)**2)), matching torch.sqrt(nn.MSELoss()(p, a))."""
    assert predicted.shape == actual.shape
    p = predicted.reshape(-1)
    a = actual.reshape(-1)
    n = p.size

    # Split off a (<128 element) lane tail; handled with plain jnp (tiny).
    n_main = (n // LANES) * LANES
    tail_sum = jnp.float32(0.0)
    if n_main != n:
        td = p[n_main:].astype(jnp.float32) - a[n_main:].astype(jnp.float32)
        tail_sum = jnp.sum(td * td)
        p = lax.slice(p, (0,), (n_main,))
        a = lax.slice(a, (0,), (n_main,))

    if n_main == 0:
        total = tail_sum
    else:
        rows = n_main // LANES
        p2 = p.reshape(rows, LANES)   # free reshape of a contiguous array
        a2 = a.reshape(rows, LANES)

        # Block sizing: big blocks amortize the fixed per-step pipeline cost.
        if rows <= CHUNK_ROWS:
            block_rows = _round_up(rows, ROW_ALIGN)
            chunk_rows = block_rows
        else:
            block_rows = min(_round_up(rows, CHUNK_ROWS), BLOCK_ROWS_MAX)
            chunk_rows = CHUNK_ROWS

        num_blocks = _cdiv(rows, block_rows)

        # Always shard across both TensorCores when there is more than one
        # block (v7x megacore; a harmless serial loop on v5e/v6e).
        num_cores = 2 if num_blocks >= 2 else 1
        blocks_per_core = _cdiv(num_blocks, num_cores)
        overhang = (num_cores * blocks_per_core) != num_blocks
        ragged_rows = (rows % block_rows) != 0
        need_mask = ragged_rows or overhang

        if overhang:
            # Clamp the duplicated last step to a valid block; its contribution
            # is zeroed by the row mask (row_ids computed from the UNclamped
            # block index are all >= rows).
            def in_map(c, s):
                return (jnp.minimum(c * blocks_per_core + s, num_blocks - 1), 0)
        else:
            def in_map(c, s):
                return (c * blocks_per_core + s, 0)

        kernel = functools.partial(
            _sq_diff_sum_kernel,
            block_rows=block_rows,
            chunk_rows=chunk_rows,
            rows_total=rows,
            blocks_per_core=blocks_per_core,
            need_mask=need_mask,
        )

        # 2 pipeline buffers x (p block + a block) in native dtype, plus margin.
        bytes_per_step = block_rows * LANES * (p2.dtype.itemsize + a2.dtype.itemsize)
        vmem_limit = int(max(2 * bytes_per_step + (8 << 20), 16 << 20))

        partials = pl.pallas_call(
            kernel,
            out_shape=jax.ShapeDtypeStruct((num_cores * SUBLANES, LANES),
                                           jnp.float32),
            grid_spec=pltpu.PrefetchScalarGridSpec(
                num_scalar_prefetch=0,
                grid=(num_cores, blocks_per_core),
                in_specs=[
                    pl.BlockSpec((block_rows, LANES), in_map),
                    pl.BlockSpec((block_rows, LANES), in_map),
                ],
                out_specs=pl.BlockSpec((SUBLANES, LANES), lambda c, s: (c, 0)),
            ),
            compiler_params=pltpu.CompilerParams(
                dimension_semantics=("parallel", "arbitrary"),
                vmem_limit_bytes=vmem_limit,
            ),
        )(p2, a2)

        total = jnp.sum(partials) + tail_sum

    return jnp.sqrt(total / jnp.float32(n))


if __name__ == "__main__":
    key = jax.random.PRNGKey(0)
    k1, k2, k3, k4, k5, k6 = jax.random.split(key, 6)

    # Primary: small NCHW shapes consistent with a conv-style model's outputs.
    predicted = jax.random.normal(k1, (2, 4, 16, 16), dtype=jnp.float32)
    actual = jax.random.normal(k2, (2, 4, 16, 16), dtype=jnp.float32)
    loss = rmse_loss(predicted, actual)
    jax.block_until_ready(loss)
    ref = jnp.sqrt(jnp.mean((predicted - actual) ** 2))
    assert jnp.allclose(loss, ref, rtol=1e-5, atol=1e-6), (loss, ref)

    # Ragged shape: exercises the row-mask (partial block) and lane-tail paths.
    p_r = jax.random.normal(k3, (2, 3, 10, 10), dtype=jnp.float32)
    a_r = jax.random.normal(k4, (2, 3, 10, 10), dtype=jnp.float32)
    loss_r = rmse_loss(p_r, a_r)
    jax.block_until_ready(loss_r)
    ref_r = jnp.sqrt(jnp.mean((p_r - a_r) ** 2))
    assert jnp.allclose(loss_r, ref_r, rtol=1e-5, atol=1e-6), (loss_r, ref_r)

    # Multi-block: exercises 4 MiB blocks, the unconditional dual-core split
    # with an odd block count (clamped index_map + duplicate-block mask), the
    # ragged final block, and the lane tail.
    n_big = 3 * BLOCK_ROWS_MAX * LANES - 75 * LANES + 53
    p_b = jax.random.normal(k5, (n_big,), dtype=jnp.float32)
    a_b = jax.random.normal(k6, (n_big,), dtype=jnp.float32)
    loss_b = rmse_loss(p_b, a_b)
    jax.block_until_ready(loss_b)
    ref_b = jnp.sqrt(jnp.mean((p_b - a_b) ** 2))
    assert jnp.allclose(loss_b, ref_b, rtol=1e-4, atol=0.0), (loss_b, ref_b)

    print("KERNEL_OK")
</pallas_src>

<mosaic_0001>
module attributes {stable_mosaic.version = 11 : i64} {
  func.func @_sq_diff_sum_kernel(%arg0: i32, %arg1: i32, %arg2: memref<16x128xf32, #tpu.memory_space<vmem>>, %arg3: memref<16x128xf32, #tpu.memory_space<vmem>>, %arg4: memref<8x128xf32, #tpu.memory_space<vmem>>) attributes {dimension_semantics = [#tpu.dimension_semantics<parallel>, #tpu.dimension_semantics<arbitrary>], iteration_bounds = array<i64: 1, 1>, scalar_prefetch = 0 : i64, scratch_operands = 0 : i64, tpu.core_type = #tpu.core_type<tc>, window_params = [{transform_indices = @transform_0, window_bounds = array<i64: 16, 128>}, {transform_indices = @transform_1, window_bounds = array<i64: 16, 128>}, {transform_indices = @transform_2, window_bounds = array<i64: 8, 128>}]} {
    %c0_i32 = arith.constant 0 : i32
    %0 = arith.cmpi eq, %arg1, %c0_i32 : i32
    %1 = arith.extui %0 : i1 to i32
    %c0_i32_0 = arith.constant 0 : i32
    %2 = arith.cmpi ne, %1, %c0_i32_0 : i32
    scf.if %2 {
      %cst_8 = arith.constant 0.000000e+00 : f32
      %18 = vector.broadcast %cst_8 : f32 to vector<8x128xf32>
      %c0_9 = arith.constant 0 : index
      %c0_10 = arith.constant 0 : index
      %19 = vector.load %arg4[%c0_9, %c0_10] : memref<8x128xf32, #tpu.memory_space<vmem>>, vector<8x128xf32>
      tpu.vector_store %arg4[%c0_9, %c0_10], %18 {strides = array<i32>} : memref<8x128xf32, #tpu.memory_space<vmem>>, vector<8x128xf32>,
    } else {
    }
    %c0 = arith.constant 0 : index
    %c0_1 = arith.constant 0 : index
    %3 = vector.load %arg4[%c0, %c0_1] : memref<8x128xf32, #tpu.memory_space<vmem>>, vector<8x128xf32>
    %cst = arith.constant 0.000000e+00 : f32
    %4 = vector.broadcast %cst : f32 to vector<8x128xf32>
    %c0_i32_2 = arith.constant 0 : i32
    %c16_i32 = arith.constant 16 : i32
    %5 = arith.muli %c0_i32_2, %c16_i32 : i32
    %6 = tpu.assume_multiple %5, 16 : i32
    %7 = arith.index_cast %6 : i32 to index
    %c0_3 = arith.constant 0 : index
    %8 = vector.load %arg2[%7, %c0_3] : memref<16x128xf32, #tpu.memory_space<vmem>>, vector<16x128xf32>
    %9 = arith.index_cast %6 : i32 to index
    %c0_4 = arith.constant 0 : index
    %10 = vector.load %arg3[%9, %c0_4] : memref<16x128xf32, #tpu.memory_space<vmem>>, vector<16x128xf32>
    %11 = arith.subf %8, %10 : vector<16x128xf32>
    %12 = arith.mulf %11, %11 : vector<16x128xf32>
    %13 = vector.shape_cast %12 : vector<16x128xf32> to vector<2x8x128xf32>
    %cst_5 = arith.constant dense<0.000000e+00> : vector<8x128xf32>
    %14 = vector.multi_reduction <add>, %13, %cst_5 [0] : vector<2x8x128xf32> to vector<8x128xf32>
    %15 = arith.addf %4, %14 : vector<8x128xf32>
    %c1_i32 = arith.constant 1 : i32
    %16 = arith.addf %3, %15 : vector<8x128xf32>
    %c0_6 = arith.constant 0 : index
    %c0_7 = arith.constant 0 : index
    %17 = vector.load %arg4[%c0_6, %c0_7] : memref<8x128xf32, #tpu.memory_space<vmem>>, vector<8x128xf32>
    tpu.vector_store %arg4[%c0_6, %c0_7], %16 {strides = array<i32>} : memref<8x128xf32, #tpu.memory_space<vmem>>, vector<8x128xf32>,
    return
  }
  func.func @transform_0(%arg0: i32, %arg1: i32) -> (i32, i32) {
    %c1_i32 = arith.constant 1 : i32
    %0 = arith.muli %arg0, %c1_i32 : i32
    %1 = arith.addi %0, %arg1 : i32
    %c0_i32 = arith.constant 0 : i32
    %c0_i32_0 = arith.constant 0 : i32
    return %1, %c0_i32 : i32, i32
  }
  func.func @transform_1(%arg0: i32, %arg1: i32) -> (i32, i32) {
    %c1_i32 = arith.constant 1 : i32
    %0 = arith.muli %arg0, %c1_i32 : i32
    %1 = arith.addi %0, %arg1 : i32
    %c0_i32 = arith.constant 0 : i32
    %c0_i32_0 = arith.constant 0 : i32
    return %1, %c0_i32 : i32, i32
  }
  func.func @transform_2(%arg0: i32, %arg1: i32) -> (i32, i32) {
    %c0_i32 = arith.constant 0 : i32
    %c0_i32_0 = arith.constant 0 : i32
    return %arg0, %c0_i32 : i32, i32
  }
}

</mosaic_0001>

<llo_original>
// kernel: tpu_custom_call.1
$region0: #{tpu_custom_call.1}
  #allocation0 [shape = 'u32[]', space=smem, size = 0x4, offset = 0x4, fixed_abs, tag = 'smem constant byte address 0x4 - core index']
  #allocation1 [shape = 'u32[72,128]{1,0:T(1,128)}', space=vmem, size = 0x9000, scoped, tag = 'internal scratch']
  %s0 = inlined_call_operand.hbm [shape: f32[16,128], index: 0, kind: input, shape index: {}]
  %s1 = inlined_call_operand.hbm [shape: f32[16,128], index: 1, kind: input, shape index: {}]
  %s2 = inlined_call_operand.hbm [shape: f32[8,128], index: 2, kind: output, shape index: {}]
  %s3 = sld [smem:[#allocation0]]
  $region30: #{tpu_custom_call.1} parent=0
    _
  %s5 = ssub.s32 1, %s3
  %s6 = scalar_select 0, %s5, %s3
  $region1: #{tpu_custom_call.1} parent=0
    #allocation2 [shape = 'u8[8192]{0}', space=vmem, size = 0x2000, scoped, tag = 'input window, operand 0, single buffered']
    #allocation3 [shape = 's32[1]{0}', space=sflag, size = 0x4, scoped, tag = 'scoped memory for tpu_custom_call.1']
    #allocation4 [shape = 's32[1]{0}', space=sflag, size = 0x4, scoped, tag = 'scoped memory for tpu_custom_call.1']
    #allocation5 [shape = 'u8[8192]{0}', space=vmem, size = 0x2000, scoped, tag = 'input window, operand 1, single buffered']
    #allocation6 [shape = 's32[1]{0}', space=sflag, size = 0x4, scoped, tag = 'scoped memory for tpu_custom_call.1']
    #allocation7 [shape = 'u8[4096]{0}', space=vmem, size = 0x1000, scoped, tag = 'output window, operand 0, single buffered']
    %7 = vsyncpa [#allocation3], 0
    %8 = vsyncpa [#allocation6], 0
    %9 = vsyncpa [#allocation4], 0
    // Predicated region
    $region2: #{tpu_custom_call.1} parent=1 // pred_check
      _
    $region3: #{tpu_custom_call.1} parent=1 // pred_check_branch
      %11 = sbr.rel (0) target = $region5
    $region4: #{tpu_custom_call.1} parent=1 // pred_region
      %s12 = sadd.s32 0, 0
      %s13 = smul.u32 2, %s12
      %15 = vsyncadd [#allocation3], 0
      %s16 = smul.addr %s13, 8
      %s17 = scalar_lea.hbm %s0, %s16
      %s18 = sshll.u32 %s17, 4
      %s19 = int_to_ptr.hbm [resolvable:$true] %s18
      %s20 = sshll.u32 [#allocation2], 4
      %s21 = int_to_ptr.vmem [resolvable:$true] %s20
      %26 = dma.hbm_to_vmem [thread:$0]  %s19, 256, %s21, [#allocation3], 128, 128, 8
    $region5: #{tpu_custom_call.1} parent=1 // pred_fallthru
      _
    // Predicated region
    $region6: #{tpu_custom_call.1} parent=1 // pred_check
      _
    $region7: #{tpu_custom_call.1} parent=1 // pred_check_branch
      %28 = sbr.rel (0) target = $region9
    $region8: #{tpu_custom_call.1} parent=1 // pred_region
      %s29 = sadd.s32 0, 0
      %s30 = smul.u32 2, %s29
      %32 = vsyncadd [#allocation6], 0
      %s33 = smul.addr %s30, 8
      %s34 = scalar_lea.hbm %s1, %s33
      %s35 = sshll.u32 %s34, 4
      %s36 = int_to_ptr.hbm [resolvable:$true] %s35
      %s37 = sshll.u32 [#allocation5], 4
      %s38 = int_to_ptr.vmem [resolvable:$true] %s37
      %43 = dma.hbm_to_vmem [thread:$0]  %s36, 256, %s38, [#allocation6], 128, 128, 8
    $region9: #{tpu_custom_call.1} parent=1 // pred_fallthru
      _
    // Predicated region
    $region10: #{tpu_custom_call.1} parent=1 // pred_check
      _
    $region11: #{tpu_custom_call.1} parent=1 // pred_check_branch
      %45 = sbr.rel (0) target = $region13
    $region12: #{tpu_custom_call.1} parent=1 // pred_region
      %47 = dma.done [#allocation3], 256
    $region13: #{tpu_custom_call.1} parent=1 // pred_fallthru
      _
    // Predicated region
    $region14: #{tpu_custom_call.1} parent=1 // pred_check
      _
    $region15: #{tpu_custom_call.1} parent=1 // pred_check_branch
      %49 = sbr.rel (0) target = $region17
    $region16: #{tpu_custom_call.1} parent=1 // pred_region
      %51 = dma.done [#allocation6], 256
    $region17: #{tpu_custom_call.1} parent=1 // pred_fallthru
      _
    %s52 = sadd.s32 0, 0
    %s53 = smul.u32 2, %s52
    %s54 = sadd.s32 0, 0
    %s55 = smul.u32 2, %s54
    %p56 = scmp.eq.s32.totalorder 0, 0
    // Predicated region
    $region18: #{tpu_custom_call.1} parent=1 // pred_check
      %p57 = pneg %p56
    $region19: #{tpu_custom_call.1} parent=1 // pred_check_branch
      %59 = sbr.rel (%p57) target = $region21
    $region20: #{tpu_custom_call.1} parent=1 // pred_region
      %60 = vst [vmem:[#allocation7] sm:$0xff] 0.0
    $region21: #{tpu_custom_call.1} parent=1 // pred_fallthru
      _
    %v61 = vld [vmem:[#allocation7] sm:$0xff]
    %v62 = vld [vmem:[#allocation2] sm:$0xff]
    %v63 = vld [vmem:[#allocation2 + $0x8] sm:$0xff]
    %v64 = vld [vmem:[#allocation5] sm:$0xff]
    %v65 = vld [vmem:[#allocation5 + $0x8] sm:$0xff]
    %v66 = vsub.f32 %v62, %v64
    %v67 = vsub.f32 %v63, %v65
    %v68 = vmul.f32 %v66, %v66
    %v69 = vmul.f32 %v67, %v67
    %v70 = vadd.f32 %v68, %v69
    %v71 = vadd.f32 %v70, 0.0
    %v72 = vadd.f32 %v61, %v71
    %73 = vst [vmem:[#allocation7] sm:$0xff] %v72
    // Predicated region
    $region22: #{tpu_custom_call.1} parent=1 // pred_check
      _
    $region23: #{tpu_custom_call.1} parent=1 // pred_check_branch
      %75 = sbr.rel (0) target = $region25
    $region24: #{tpu_custom_call.1} parent=1 // pred_region
      %77 = vsyncadd [#allocation4], 0
      %s79 = sshll.u32 [#allocation7], 4
      %s80 = int_to_ptr.vmem [resolvable:$true] %s79
      %s81 = sshll.u32 %s2, 4
      %s82 = int_to_ptr.hbm [resolvable:$true] %s81
      %84 = dma.vmem_to_hbm [thread:$0]  %s80, 128, %s82, [#allocation4]
    $region25: #{tpu_custom_call.1} parent=1 // pred_fallthru
      _
    // Predicated region
    $region26: #{tpu_custom_call.1} parent=1 // pred_check
      _
    $region27: #{tpu_custom_call.1} parent=1 // pred_check_branch
      %86 = sbr.rel (0) target = $region29
    $region28: #{tpu_custom_call.1} parent=1 // pred_region
      %88 = dma.done [#allocation4], 128
    $region29: #{tpu_custom_call.1} parent=1 // pred_fallthru
      _
    %89 = vsyncpa [#allocation3], 1
    %90 = vsyncpa [#allocation6], 1
    %91 = vsyncpa [#allocation4], 1

</llo_original>
